<compile_context>
chip_gen: v5e
topology: v5e:2x2
jax: 0.10.0
libtpu: 0.0.40
codegen_flags: <defaults>
</compile_context>

<pallas_src>
import functools
import math

import jax
import jax.numpy as jnp
from jax.experimental import pallas as pl
from jax.experimental.pallas import tpu as pltpu


# ----------------------------------------------------------------------------
# Kernel
# ----------------------------------------------------------------------------
def _pe_kernel(seed_ref, x_ref, tab_ref, o_ref, *, training, threshold, inv_keep):
    """y = dropout(x + pe) on a lane-dense (tile_s, B*D) block.

    tab_ref: (2, B*D) f32 table; row 0 = angle rate per column,
             row 1 = phase offset (0.0 for even d -> sin, pi/2 for odd d -> cos).
    """
    tile_s, n_cols = x_ref.shape
    i = pl.program_id(0)

    x = x_ref[...].astype(jnp.float32)            # (tile_s, n_cols)
    rate = tab_ref[0:1, :]                        # (1, n_cols)
    phase = tab_ref[1:2, :]                       # (1, n_cols)

    # Global sequence position of each row in this tile.
    row = jax.lax.broadcasted_iota(jnp.int32, (tile_s, 1), 0) + i * tile_s
    pos = row.astype(jnp.float32)                 # (tile_s, 1)

    # cos(a) == sin(a + pi/2): one EUP pass covers both even/odd channels.
    pe = jnp.sin(pos * rate + phase)              # (tile_s, n_cols)
    y = x + pe

    if training and threshold > 0:
        # Deterministic counter-based hash (portable: plain uint32 VPU ops).
        # Keyed on the global element index so tiles are independent -> safe
        # under "parallel" grid semantics.
        lane = jax.lax.broadcasted_iota(jnp.int32, (1, n_cols), 1)
        flat = (row.astype(jnp.uint32) * jnp.uint32(n_cols)
                + lane.astype(jnp.uint32))                        # (tile_s, n_cols)
        seed = seed_ref[0].astype(jnp.uint32)

        h = flat * jnp.uint32(0x9E3779B9) + seed * jnp.uint32(0x85EBCA6B)
        h = h ^ (h >> 16)
        h = h * jnp.uint32(0x7FEB352D)
        h = h ^ (h >> 15)
        h = h * jnp.uint32(0x846CA68B)
        h = h ^ (h >> 16)

        # Integer-threshold compare: keep with probability (1 - p).
        keep = h >= jnp.uint32(threshold)
        y = jnp.where(keep, y * inv_keep, 0.0)

    o_ref[...] = y.astype(o_ref.dtype)


# ----------------------------------------------------------------------------
# Wrapper helpers
# ----------------------------------------------------------------------------
def make_pe_buffer(d_model, max_len, dtype=jnp.float32):
    """Reference pe buffer, identical math to the PyTorch __init__ (for tests)."""
    position = jnp.arange(max_len, dtype=jnp.float32)[:, None]
    div_term = jnp.exp(jnp.arange(0, d_model, 2, dtype=jnp.float32)
                       * (-math.log(10000.0) / d_model))
    pe = jnp.zeros((max_len, 1, d_model), dtype=jnp.float32)
    pe = pe.at[:, 0, 0::2].set(jnp.sin(position * div_term))
    pe = pe.at[:, 0, 1::2].set(jnp.cos(position * div_term))
    return pe.astype(dtype)


def _build_pe_tables(d_model, batch):
    """(2, B*D) f32 table.

    row 0: exp(-ln(1e4) * 2*floor(d/2) / D)   (angle rate)
    row 1: (d % 2) * pi/2                     (phase: sin for even, cos for odd)
    Column order matches the (S, B, D) -> (S, B*D) flatten (col = b*D + d).
    """
    d = jnp.arange(d_model, dtype=jnp.int32)
    d_even = (d - (d & 1)).astype(jnp.float32)
    rate = jnp.exp(d_even * (-math.log(10000.0) / d_model))      # (D,)
    phase = (d & 1).astype(jnp.float32) * (math.pi / 2.0)        # (D,)
    return jnp.stack([jnp.tile(rate, (batch,)),
                      jnp.tile(phase, (batch,))], axis=0)        # (2, B*D)


def _choose_tile_s(S, row_bytes, target_bytes=2 << 20):
    """Largest row-count per block (~2 MiB) that divides S and keeps the
    sublane dim a multiple of 8 (or the full dim)."""
    max_rows = max(1, target_bytes // max(row_bytes, 1))
    if S <= max_rows:
        return S
    t = min(S, (max_rows // 8) * 8)
    while t >= 8:
        if S % t == 0:
            return t
        t -= 8
    return S  # rare fallback (e.g. prime S): single full-seq block


# ----------------------------------------------------------------------------
# Public forward
# ----------------------------------------------------------------------------
def positional_encoding_forward(x, *, p=0.0, training=False, seed=0, tile_s=None):
    """x: (S, B, D). Returns dropout(x + pe[:S]) with pe as in the PyTorch module."""
    S, B, D = x.shape
    n_cols = B * D
    x2 = x.reshape(S, n_cols)                      # lane-dense slab (free reshape)
    tables = _build_pe_tables(D, B)
    seed_arr = jnp.array([seed], dtype=jnp.int32)

    if tile_s is None:
        tile_s = _choose_tile_s(S, n_cols * x.dtype.itemsize)
    assert S % tile_s == 0
    grid = (S // tile_s,)

    threshold = min(max(int(round(float(p) * 4294967296.0)), 0), 4294967295)
    inv_keep = (1.0 / (1.0 - float(p))) if float(p) < 1.0 else 0.0
    kernel = functools.partial(_pe_kernel, training=bool(training),
                               threshold=threshold, inv_keep=inv_keep)

    out2 = pl.pallas_call(
        kernel,
        out_shape=jax.ShapeDtypeStruct((S, n_cols), x.dtype),
        grid_spec=pltpu.PrefetchScalarGridSpec(
            num_scalar_prefetch=1,                           # seed lands in SMEM
            grid=grid,
            in_specs=[
                pl.BlockSpec((tile_s, n_cols), lambda i, s: (i, 0)),   # x tile
                pl.BlockSpec((2, n_cols), lambda i, s: (0, 0)),        # tiny pe table
            ],
            out_specs=pl.BlockSpec((tile_s, n_cols), lambda i, s: (i, 0)),
        ),
        compiler_params=pltpu.CompilerParams(
            dimension_semantics=("parallel",),               # shard across TCs on v7x
            vmem_limit_bytes=32 * 1024 * 1024,               # > v5e's 16 MiB default
        ),
    )(seed_arr, x2, tables)

    return out2.reshape(S, B, D)


# ----------------------------------------------------------------------------
# Self-test
# ----------------------------------------------------------------------------
if __name__ == "__main__":
    # Module config: d_model=32, max_len=16, dropout=0.1
    d_model, max_len, dropout_p = 32, 16, 0.1
    S, B = 8, 2

    key = jax.random.PRNGKey(0)
    x = jax.random.normal(key, (S, B, d_model), dtype=jnp.float32)

    pe = make_pe_buffer(d_model, max_len)
    ref = x + pe[:S]

    # Eval mode (dropout is identity): matches x + pe[:S].
    out_eval = positional_encoding_forward(x, p=dropout_p, training=False)
    out_eval = jax.block_until_ready(out_eval)
    assert out_eval.shape == (S, B, d_model)
    assert jnp.allclose(out_eval, ref, atol=1e-4, rtol=1e-4), "eval-mode mismatch"

    # Train mode: every output element is either 0 or (x+pe)/(1-p).
    out_train = positional_encoding_forward(x, p=dropout_p, training=True, seed=1234)
    out_train = jax.block_until_ready(out_train)
    assert out_train.shape == (S, B, d_model)
    scaled = ref / (1.0 - dropout_p)
    ok = jnp.isclose(out_train, scaled, atol=1e-3, rtol=1e-3) | jnp.isclose(
        out_train, 0.0, atol=1e-6)
    assert bool(jnp.all(ok)), "train-mode values must be 0 or scaled(x+pe)"

    print("KERNEL_OK")
</pallas_src>

<mosaic_0001>
module attributes {stable_mosaic.version = 11 : i64} {
  func.func @_pe_kernel(%arg0: i32, %arg1: memref<1xi32, #tpu.memory_space<smem>>, %arg2: memref<8x64xf32, #tpu.memory_space<vmem>>, %arg3: memref<2x64xf32, #tpu.memory_space<vmem>>, %arg4: memref<8x64xf32, #tpu.memory_space<vmem>>) attributes {dimension_semantics = [#tpu.dimension_semantics<parallel>], iteration_bounds = array<i64: 1>, scalar_prefetch = 1 : i64, scratch_operands = 0 : i64, tpu.core_type = #tpu.core_type<tc>, window_params = [{transform_indices = @transform_0, window_bounds = array<i64: 8, 64>}, {pipeline_mode = #tpu.pipeline_mode<synchronous>, transform_indices = @transform_1, window_bounds = array<i64: 2, 64>}, {transform_indices = @transform_2, window_bounds = array<i64: 8, 64>}]} {
    %c0 = arith.constant 0 : index
    %c0_0 = arith.constant 0 : index
    %0 = vector.load %arg2[%c0, %c0_0] : memref<8x64xf32, #tpu.memory_space<vmem>>, vector<8x64xf32>
    %c0_1 = arith.constant 0 : index
    %c0_2 = arith.constant 0 : index
    %1 = vector.load %arg3[%c0_1, %c0_2] : memref<2x64xf32, #tpu.memory_space<vmem>>, vector<1x64xf32>
    %c1 = arith.constant 1 : index
    %c0_3 = arith.constant 0 : index
    %2 = vector.load %arg3[%c1, %c0_3] : memref<2x64xf32, #tpu.memory_space<vmem>>, vector<1x64xf32>
    %3 = tpu.iota {dimensions = array<i32: 0>} : vector<8x1xi32>
    %c8_i32 = arith.constant 8 : i32
    %4 = arith.muli %arg0, %c8_i32 : i32
    %5 = vector.broadcast %4 : i32 to vector<8x1xi32>
    %6 = arith.addi %3, %5 : vector<8x1xi32>
    %7 = arith.sitofp %6 : vector<8x1xi32> to vector<8x1xf32>
    %8 = vector.broadcast %7 : vector<8x1xf32> to vector<8x64xf32>
    %9 = vector.broadcast %1 : vector<1x64xf32> to vector<8x64xf32>
    %10 = arith.mulf %8, %9 : vector<8x64xf32>
    %11 = vector.broadcast %2 : vector<1x64xf32> to vector<8x64xf32>
    %12 = arith.addf %10, %11 : vector<8x64xf32>
    %13 = math.sin %12 : vector<8x64xf32>
    %14 = arith.addf %0, %13 : vector<8x64xf32>
    %c0_4 = arith.constant 0 : index
    %c0_5 = arith.constant 0 : index
    %15 = vector.load %arg4[%c0_4, %c0_5] : memref<8x64xf32, #tpu.memory_space<vmem>>, vector<8x64xf32>
    tpu.vector_store %arg4[%c0_4, %c0_5], %14 {strides = array<i32>} : memref<8x64xf32, #tpu.memory_space<vmem>>, vector<8x64xf32>,
    return
  }
  func.func @transform_0(%arg0: i32, %arg1: memref<1xi32, #tpu.memory_space<smem>>) -> (i32, i32) {
    %c0_i32 = arith.constant 0 : i32
    %c0_i32_0 = arith.constant 0 : i32
    return %arg0, %c0_i32 : i32, i32
  }
  func.func @transform_1(%arg0: i32, %arg1: memref<1xi32, #tpu.memory_space<smem>>) -> (i32, i32) {
    %c0_i32 = arith.constant 0 : i32
    %c0_i32_0 = arith.constant 0 : i32
    %c0_i32_1 = arith.constant 0 : i32
    return %c0_i32, %c0_i32_0 : i32, i32
  }
  func.func @transform_2(%arg0: i32, %arg1: memref<1xi32, #tpu.memory_space<smem>>) -> (i32, i32) {
    %c0_i32 = arith.constant 0 : i32
    %c0_i32_0 = arith.constant 0 : i32
    return %arg0, %c0_i32 : i32, i32
  }
}

</mosaic_0001>

<llo_original>
// kernel: tpu_custom_call.1
$region0: #{tpu_custom_call.1}
  #allocation0 [shape = 'u32[]', space=smem, size = 0x4, offset = 0x4, fixed_abs, tag = 'smem constant byte address 0x4 - core index']
  #allocation1 [shape = 'u32[72,128]{1,0:T(1,128)}', space=vmem, size = 0x9000, scoped, tag = 'internal scratch']
  #allocation2 [shape = 's32[1]{0}', space=sflag, size = 0x4, scoped, tag = 'scoped memory for tpu_custom_call.1']
  #allocation3 [shape = 's32[1]{0:T(128)S(6)}', space=smem, size = 0x200, scoped, tag = 'prefetched SMEM operand 0']
  %s0 = inlined_call_operand.<no memory space> [shape: s32[1], index: 0, kind: input, shape index: {}]
  %s1 = inlined_call_operand.hbm [shape: f32[8,64], index: 1, kind: input, shape index: {}]
  %s2 = inlined_call_operand.vmem [shape: f32[2,64], index: 2, kind: input, shape index: {}]
  %s3 = inlined_call_operand.hbm [shape: f32[8,64], index: 3, kind: output, shape index: {}]
  %s4 = sld [smem:[#allocation0]]
  $region22: #{tpu_custom_call.1} parent=0
    _
  %s6 = ssub.s32 1, %s4
  %s7 = scalar_select 0, %s6, %s4
  %8 = sst [smem:[#allocation3]] %s0
  $region1: #{tpu_custom_call.1} parent=0
    #allocation4 [shape = 'u8[4096]{0}', space=vmem, size = 0x1000, scoped, tag = 'input window, operand 1, single buffered']
    #allocation5 [shape = 's32[1]{0}', space=sflag, size = 0x4, scoped, tag = 'scoped memory for tpu_custom_call.1']
    #allocation6 [shape = 's32[1]{0}', space=sflag, size = 0x4, scoped, tag = 'scoped memory for tpu_custom_call.1']
    #allocation7 [shape = 'u8[4096]{0}', space=vmem, size = 0x1000, scoped, tag = 'output window, operand 0, single buffered']
    %9 = vsyncpa [#allocation5], 0
    %10 = vsyncpa [#allocation6], 0
    // Predicated region
    $region2: #{tpu_custom_call.1} parent=1 // pred_check
      _
    $region3: #{tpu_custom_call.1} parent=1 // pred_check_branch
      %12 = sbr.rel (0) target = $region5
    $region4: #{tpu_custom_call.1} parent=1 // pred_region
      %14 = vsyncadd [#allocation5], 0
      %s16 = sshll.u32 %s1, 4
      %s17 = int_to_ptr.hbm [resolvable:$true] %s16
      %s18 = sshll.u32 [#allocation4], 4
      %s19 = int_to_ptr.vmem [resolvable:$true] %s18
      %21 = dma.hbm_to_vmem [thread:$0]  %s17, 128, %s19, [#allocation5]
    $region5: #{tpu_custom_call.1} parent=1 // pred_fallthru
      _
    // Predicated region
    $region6: #{tpu_custom_call.1} parent=1 // pred_check
      _
    $region7: #{tpu_custom_call.1} parent=1 // pred_check_branch
      %23 = sbr.rel (0) target = $region9
    $region8: #{tpu_custom_call.1} parent=1 // pred_region
      _
    $region9: #{tpu_custom_call.1} parent=1 // pred_fallthru
      _
    // Predicated region
    $region10: #{tpu_custom_call.1} parent=1 // pred_check
      _
    $region11: #{tpu_custom_call.1} parent=1 // pred_check_branch
      %25 = sbr.rel (0) target = $region13
    $region12: #{tpu_custom_call.1} parent=1 // pred_region
      %27 = dma.done [#allocation5], 128
    $region13: #{tpu_custom_call.1} parent=1 // pred_fallthru
      _
    %v28 = vld [vmem:[#allocation4] sm:$0xff]
    %v29 = vld [vmem:[%s2] sm:$0x1]
    %v30 = vld [vmem:[%s2 + $0x1] sm:$0x1]
    %v31 = vlaneseq
    %v32 = vshrl.u32 %v31, 7
    %s33 = smul.u32 0, 8
    %v34 = vstv %s33
    %v35 = vadd.s32 %v32, %v34
    %v36 = vcvt.s32.f32 %v35
    %v37 = vperm.slane %v29, 0
    %v38 = vmul.f32 %v36, %v37
    %v39 = vperm.slane %v30, 0
    %v40 = vadd.f32 %v38, %v39
    %v41 = vand.u32 2147483647, %v40
    %vm42 = vcmp.le.f32.partialorder %v41, 0.7853982
    %vm43 = vcmp.lt.s32.totalorder %v40, 0
    %v44 = vand.u32 %v40, 2139095040
    %v45 = vshrl.u32 %v44, 23
    %v46 = vsub.s32 %v45, 127
    %v47 = vand.u32 2147483647, %v40
    %v48 = vand.u32 %v47, 8388607
    %v49 = vor.u32 %v48, 8388608
    %v50 = vsub.s32 0, %v49
    %v51 = vadd.s32 %v46, 1
    %vm52 = vcmp.gt.s32.totalorder %v51, 0
    %v53 = vsel %vm52, %v51, 0
    %v54 = vshrl.u32 %v53, 5
    %v55 = vand.u32 %v53, 31
    %v56 = vsub.s32 32, %v55
    %v57 = vshrl.u32 683565275, %v56
    %v58 = vshll.u32 683565275, %v55
    %v59 = vshrl.u32 2475754826, %v56
    %v60 = vor.u32 %v58, %v59
    %v61 = vshll.u32 2475754826, %v55
    %v62 = vshrl.u32 2131351028, %v56
    %v63 = vor.u32 %v61, %v62
    %v64 = vshll.u32 2131351028, %v55
    %v65 = vshrl.u32 2102212464, %v56
    %v66 = vor.u32 %v64, %v65
    %v67 = vshll.u32 2102212464, %v55
    %v68 = vshrl.u32 920167782, %v56
    %v69 = vor.u32 %v67, %v68
    %v70 = vshll.u32 920167782, %v55
    %v71 = vshrl.u32 1326507024, %v56
    %v72 = vor.u32 %v70, %v71
    %vm73 = vcmp.lt.s32.totalorder %v54, 1
    %vm74 = vcmp.lt.s32.totalorder %v54, 2
    %vm75 = vcmp.lt.s32.totalorder %v54, 3
    %vm76 = vcmp.lt.s32.totalorder %v54, 4
    %v77 = vsel %vm73, %v57, %v60
    %v78 = vsel %vm76, %v66, 2102212464
    %v79 = vsel %vm75, %v63, %v78
    %v80 = vsel %vm74, %v77, %v79
    %v81 = vsel %vm73, %v60, %v63
    %v82 = vsel %vm76, %v69, 920167782
    %v83 = vsel %vm75, %v66, %v82
    %v84 = vsel %vm74, %v81, %v83
    %v85 = vsel %vm73, %v63, %v66
    %v86 = vsel %vm76, %v72, 1326507024
    %v87 = vsel %vm75, %v69, %v86
    %v88 = vsel %vm74, %v85, %v87
    %v89 = vshll.u32 %v49, 8
    %v90 = vand.u32 %v89, 65535
    %v91 = vshrl.u32 %v89, 16
    %v92 = vand.u32 %v88, 65535
    %v93 = vshrl.u32 %v88, 16
    %v94 = vmul.u32 %v90, %v92
    %v95 = vmul.u32 %v90, %v93
    %v96 = vmul.u32 %v91, %v92
    %v97 = vmul.u32 %v91, %v93
    %v98 = vshll.u32 %v95, 16
    %v99 = vshrl.u32 %v95, 16
    %v100 = vshll.u32 %v96, 16
    %v101 = vshrl.u32 %v96, 16
    %vm102 = vc.u32 %v94, %v98
    %v103 = vsel %vm102, 1, 0
    %v104 = vadd.s32 %v94, %v98
    %v105 = vadd.s32 %v97, %v103
    %vm106 = vc.u32 %v104, %v100
    %v107 = vsel %vm106, 1, 0
    %v108 = vadd.s32 %v104, %v100
    %v109 = vadd.s32 %v105, %v107
    %v110 = vadd.s32 %v109, %v99
    %v111 = vadd.s32 %v110, %v101
    %v112 = vand.u32 %v89, 65535
    %v113 = vshrl.u32 %v89, 16
    %v114 = vand.u32 %v84, 65535
    %v115 = vshrl.u32 %v84, 16
    %v116 = vmul.u32 %v112, %v114
    %v117 = vmul.u32 %v112, %v115
    %v118 = vmul.u32 %v113, %v114
    %v119 = vmul.u32 %v113, %v115
    %v120 = vshll.u32 %v117, 16
    %v121 = vshrl.u32 %v117, 16
    %v122 = vshll.u32 %v118, 16
    %v123 = vshrl.u32 %v118, 16
    %vm124 = vc.u32 %v116, %v120
    %v125 = vsel %vm124, 1, 0
    %v126 = vadd.s32 %v116, %v120
    %v127 = vadd.s32 %v119, %v125
    %vm128 = vc.u32 %v126, %v122
    %v129 = vsel %vm128, 1, 0
    %v130 = vadd.s32 %v126, %v122
    %v131 = vadd.s32 %v127, %v129
    %v132 = vadd.s32 %v131, %v121
    %v133 = vadd.s32 %v132, %v123
    %v134 = vmul.u32 %v89, %v80
    %v135 = vadd.s32 %v111, %v130
    %vm136 = vc.u32 %v111, %v130
    %v137 = vadd.s32 %v133, 1
    %v138 = vsel %vm136, %v137, %v133
    %v139 = vadd.s32 %v134, %v138
    %v140 = vadd.s32 %v139, 536870912
    %v141 = vshrl.u32 %v140, 30
    %v142 = vshll.u32 %v141, 30
    %v143 = vsub.s32 %v139, %v142
    %vm144 = vcmp.lt.s32.totalorder %v143, 0
    %v145 = vsub.s32 0, %v143
    %v146 = vsel %vm144, %v145, %v143
    %v147 = vclz %v146
    %v148 = vsub.s32 %v147, 2
    %vm149 = vcmp.gt.s32.totalorder 0, %v148
    %v150 = vsel %vm149, 0, %v148
    %v151 = vsub.s32 32, %v150
    %v152 = vshll.u32 %v143, %v150
    %v153 = vshrl.u32 %v135, %v151
    %v154 = vor.u32 %v152, %v153
    %v155 = vsub.s32 4294967266, %v150
    %v156 = vadd.s32 %v155, 127
    %v157 = vshll.u32 %v156, 23
    %v158 = vor.u32 4788187, %v157
    %v159 = vand.u32 2147483647, %v158
    %v161 = vcvt.s32.f32 %v154
    %v162 = vmul.f32 %v161, %v159
    %v163 = vxor.u32 %v162, 2147483648
    %v164 = vsel %vm43, %v163, %v162
    %v165 = vsub.s32 4, %v141
    %v166 = vsel %vm43, %v165, %v141
    %v167 = vsel %vm42, %v40, %v164
    %v168 = vsel %vm42, 0, %v166
    %v169 = vmul.f32 %v167, %v167
    %v170 = vmul.f32 %v169, -0.001358992
    %v171 = vadd.f32 %v170, 0.041655596
    %v172 = vmul.f32 %v169, %v171
    %v173 = vadd.f32 %v172, -0.4999988
    %v174 = vmul.f32 %v169, %v173
    %v175 = vadd.f32 1.0, %v174
    %v176 = vmul.f32 %v167, %v167
    %v177 = vmul.f32 %v176, -0.00019511016
    %v178 = vadd.f32 %v177, 0.008332121
    %v179 = vmul.f32 %v176, %v178
    %v180 = vadd.f32 %v179, -0.16666654
    %v181 = vmul.f32 %v176, %v180
    %v182 = vadd.f32 %v181, 1.0
    %v183 = vmul.f32 %v182, %v167
    %vm184 = vweird.f32 %v40
    %v185 = vadd.s32 %v168, 3
    %v186 = vand.u32 %v185, 3
    %vm187 = vcmp.lt.s32.totalorder %v186, 2
    %vm188 = vcmp.eq.s32.totalorder %v186, 0
    %v189 = vxor.u32 %v183, 2147483648
    %v190 = vsel %vm188, %v175, %v189
    %vm191 = vcmp.eq.s32.totalorder %v186, 2
    %v192 = vxor.u32 %v175, 2147483648
    %v193 = vsel %vm191, %v192, %v183
    %v194 = vsel %vm187, %v190, %v193
    %v195 = vsel %vm184, nan, %v194
    %v196 = vadd.f32 %v28, %v195
    %vm197 = vcmask 523264
    %198 = vst.msk [vmem:[#allocation7] sm:$0xff] %vm197, %v196
    // Predicated region
    $region14: #{tpu_custom_call.1} parent=1 // pred_check
      _
    $region15: #{tpu_custom_call.1} parent=1 // pred_check_branch
      %200 = sbr.rel (0) target = $region17
    $region16: #{tpu_custom_call.1} parent=1 // pred_region
      %202 = vsyncadd [#allocation6], 0
      %s204 = sshll.u32 [#allocation7], 4
      %s205 = int_to_ptr.vmem [resolvable:$true] %s204
      %s206 = sshll.u32 %s3, 4
      %s207 = int_to_ptr.hbm [resolvable:$true] %s206
      %209 = dma.vmem_to_hbm [thread:$0]  %s205, 128, %s207, [#allocation6]
    $region17: #{tpu_custom_call.1} parent=1 // pred_fallthru
      _
    // Predicated region
    $region18: #{tpu_custom_call.1} parent=1 // pred_check
      _
    $region19: #{tpu_custom_call.1} parent=1 // pred_check_branch
      %211 = sbr.rel (0) target = $region21
    $region20: #{tpu_custom_call.1} parent=1 // pred_region
      %213 = dma.done [#allocation6], 128
    $region21: #{tpu_custom_call.1} parent=1 // pred_fallthru
      _
    %214 = vsyncpa [#allocation5], 1
    %215 = vsyncpa [#allocation6], 1

</llo_original>
